<compile_context>
chip_gen: v5e
topology: v5e:2x2
jax: 0.10.0
libtpu: 0.0.40
codegen_flags: <defaults>
</compile_context>

<pallas_src>
import numpy as np
import jax
import jax.numpy as jnp
from jax import lax
from jax.experimental import pallas as pl
from jax.experimental.pallas import tpu as pltpu


def _nearest_indices(out_size, in_size):
    # PyTorch 'nearest': src = min(floor(dst * in_size / out_size), in_size - 1)
    idx = np.floor(np.arange(out_size) * (in_size / out_size)).astype(np.int32)
    return np.minimum(idx, in_size - 1)


def _resize_kernel(r_ref, ct_ref, x_ref, o_ref):
    bblk, h, w = x_ref.shape
    new_h = r_ref.shape[0]
    new_w = ct_ref.shape[1]

    x = x_ref[...].astype(r_ref.dtype)                      # no-op for float inputs
    # --- column gather: one big MXU matmul (Bblk*H, W) @ (W, newW) ---
    xc = jnp.dot(x.reshape(bblk * h, w), ct_ref[...],
                 preferred_element_type=jnp.float32)        # (Bblk*H, newW)
    xc = xc.reshape(bblk, h, new_w).astype(r_ref.dtype)     # exact: one-hot selection
    # --- row gather: batched matmul against the shared one-hot R ---
    r_b = jnp.broadcast_to(r_ref[...][None], (bblk, new_h, h))
    out = lax.dot_general(
        r_b, xc,
        dimension_numbers=(((2,), (1,)), ((0,), (0,))),
        preferred_element_type=jnp.float32)                 # (Bblk, newH, newW)
    o_ref[...] = out.astype(o_ref.dtype)


def _pick_batch_block(total, per_image_bytes):
    """Largest divisor of `total` whose block fits a conservative VMEM budget,
    while keeping at least 2 grid steps when possible (v7x has 2 TensorCores)."""
    budget = 8 * 1024 * 1024                      # safe inside v7x scoped VMEM
    cap = max(1, int(budget // max(1, 2 * per_image_bytes)))   # double-buffered
    cap = min(cap, total)
    if total >= 2:
        cap = min(cap, max(1, total // 2))
    for d in range(cap, 0, -1):
        if total % d == 0:
            return d
    return 1


def resize_nearest(x, resize_ratio):
    """Equivalent of F.interpolate(x, size=int(np.rint(H*ratio)), mode='nearest')."""
    N, C, H, W = x.shape
    new_size = int(np.rint(H * resize_ratio))     # module derives size from dim 2 only
    B = N * C

    cdt = x.dtype if jnp.issubdtype(x.dtype, jnp.floating) else jnp.float32
    row_idx = _nearest_indices(new_size, H)
    col_idx = _nearest_indices(new_size, W)
    R = jnp.asarray(np.eye(H, dtype=np.float32)[row_idx], dtype=cdt)      # (new, H)
    Ct = jnp.asarray(np.eye(W, dtype=np.float32)[col_idx].T, dtype=cdt)   # (W, new)

    xf = x.reshape(B, H, W)        # free reshape; native dtype (no extra HBM pass)

    isz = np.dtype(x.dtype).itemsize
    csz = np.dtype(cdt).itemsize
    per_img = ((H * W + new_size * new_size) * isz
               + H * new_size * 4 + new_size * new_size * 4
               + new_size * H * csz)
    bblk = _pick_batch_block(B, per_img)
    grid = (B // bblk,)

    cost = pl.CostEstimate(
        flops=2 * B * new_size * H * (W + new_size),
        transcendentals=0,
        bytes_accessed=int(B * H * W * isz + B * new_size * new_size * isz
                           + R.size * csz + Ct.size * csz),
    )

    out = pl.pallas_call(
        _resize_kernel,
        out_shape=jax.ShapeDtypeStruct((B, new_size, new_size), x.dtype),
        grid=grid,
        in_specs=[
            pl.BlockSpec((new_size, H), lambda b: (0, 0)),        # R  (resident)
            pl.BlockSpec((W, new_size), lambda b: (0, 0)),        # Ct (resident)
            pl.BlockSpec((bblk, H, W), lambda b: (b, 0, 0)),      # image block
        ],
        out_specs=pl.BlockSpec((bblk, new_size, new_size), lambda b: (b, 0, 0)),
        compiler_params=pltpu.CompilerParams(
            dimension_semantics=("parallel",),
            vmem_limit_bytes=32 * 1024 * 1024,
        ),
        cost_estimate=cost,
    )(R, Ct, xf)

    return out.reshape(N, C, new_size, new_size)   # free reshape, native dtype


class Resize:
    """Resize the image. The target size is original size * resize_ratio."""

    def __init__(self, resize_ratio, interpolation_method='nearest'):
        assert interpolation_method == 'nearest', \
            "only 'nearest' is implemented"  # TODO(synk): other interpolation modes
        self.resize_ratio = resize_ratio
        self.interpolation_method = interpolation_method

    def __call__(self, noised_and_cover):
        noised_image = noised_and_cover[0]
        noised_and_cover[0] = resize_nearest(noised_image, self.resize_ratio)
        return noised_and_cover


if __name__ == "__main__":
    key = jax.random.PRNGKey(0)
    k1, k2 = jax.random.split(key)
    noised = jax.random.normal(k1, (2, 4, 16, 16), dtype=jnp.float32)
    cover = jax.random.normal(k2, (2, 4, 16, 16), dtype=jnp.float32)

    model = Resize(resize_ratio=0.5)
    out = model([noised, cover])
    resized = jax.block_until_ready(out[0])

    # Pure-numpy nearest reference (same index rule as PyTorch 'nearest').
    new_size = int(np.rint(16 * 0.5))
    ri = _nearest_indices(new_size, 16)
    ci = _nearest_indices(new_size, 16)
    ref = np.asarray(noised)[:, :, ri][:, :, :, ci]

    assert resized.shape == (2, 4, new_size, new_size)
    assert resized.dtype == noised.dtype
    np.testing.assert_allclose(np.asarray(resized), ref, atol=1e-5, rtol=1e-5)
    print("KERNEL_OK")
</pallas_src>

<mosaic_0001>
module attributes {stable_mosaic.version = 11 : i64} {
  func.func @_resize_kernel(%arg0: i32, %arg1: memref<8x16xf32, #tpu.memory_space<vmem>>, %arg2: memref<16x8xf32, #tpu.memory_space<vmem>>, %arg3: memref<4x16x16xf32, #tpu.memory_space<vmem>>, %arg4: memref<4x8x8xf32, #tpu.memory_space<vmem>>) attributes {dimension_semantics = [#tpu.dimension_semantics<parallel>], iteration_bounds = array<i64: 2>, scalar_prefetch = 0 : i64, scratch_operands = 0 : i64, tpu.core_type = #tpu.core_type<tc>, window_params = [{pipeline_mode = #tpu.pipeline_mode<synchronous>, transform_indices = @transform_0, window_bounds = array<i64: 8, 16>}, {pipeline_mode = #tpu.pipeline_mode<synchronous>, transform_indices = @transform_1, window_bounds = array<i64: 16, 8>}, {transform_indices = @transform_2, window_bounds = array<i64: 4, 16, 16>}, {transform_indices = @transform_3, window_bounds = array<i64: 4, 8, 8>}]} {
    %c0 = arith.constant 0 : index
    %c0_0 = arith.constant 0 : index
    %c0_1 = arith.constant 0 : index
    %0 = vector.load %arg3[%c0, %c0_0, %c0_1] : memref<4x16x16xf32, #tpu.memory_space<vmem>>, vector<4x16x16xf32>
    %1 = vector.shape_cast %0 : vector<4x16x16xf32> to vector<64x16xf32>
    %c0_2 = arith.constant 0 : index
    %c0_3 = arith.constant 0 : index
    %2 = vector.load %arg2[%c0_2, %c0_3] : memref<16x8xf32, #tpu.memory_space<vmem>>, vector<16x8xf32>
    %cst = arith.constant dense<0.000000e+00> : vector<64x8xf32>
    %3 = tpu.matmul %1, %2, %cst {dimension_numbers = #tpu.dot_dimension_numbers<[1], [0], [0], [1], [0, 0, 1, 1], [], []>} : vector<64x16xf32>, vector<16x8xf32>, vector<64x8xf32> -> vector<64x8xf32>
    %4 = vector.shape_cast %3 : vector<64x8xf32> to vector<4x16x8xf32>
    %c0_4 = arith.constant 0 : index
    %c0_5 = arith.constant 0 : index
    %5 = vector.load %arg1[%c0_4, %c0_5] : memref<8x16xf32, #tpu.memory_space<vmem>>, vector<8x16xf32>
    %6 = vector.shape_cast %5 : vector<8x16xf32> to vector<1x8x16xf32>
    %7 = vector.shape_cast %6 : vector<1x8x16xf32> to vector<1x8x16xf32>
    %8 = vector.broadcast %7 : vector<1x8x16xf32> to vector<4x8x16xf32>
    %cst_6 = arith.constant dense<0.000000e+00> : vector<4x8x8xf32>
    %9 = tpu.matmul %8, %4, %cst_6 {dimension_numbers = #tpu.dot_dimension_numbers<[2], [1], [1], [2], [0, 0, 0, 1, 1, 2], [0], [0]>} : vector<4x8x16xf32>, vector<4x16x8xf32>, vector<4x8x8xf32> -> vector<4x8x8xf32>
    %c0_7 = arith.constant 0 : index
    %c0_8 = arith.constant 0 : index
    %c0_9 = arith.constant 0 : index
    %10 = vector.load %arg4[%c0_7, %c0_8, %c0_9] : memref<4x8x8xf32, #tpu.memory_space<vmem>>, vector<4x8x8xf32>
    tpu.vector_store %arg4[%c0_7, %c0_8, %c0_9], %9 {strides = array<i32>} : memref<4x8x8xf32, #tpu.memory_space<vmem>>, vector<4x8x8xf32>,
    return
  }
  func.func @transform_0(%arg0: i32) -> (i32, i32) {
    %c0_i32 = arith.constant 0 : i32
    %c0_i32_0 = arith.constant 0 : i32
    %c0_i32_1 = arith.constant 0 : i32
    return %c0_i32, %c0_i32_0 : i32, i32
  }
  func.func @transform_1(%arg0: i32) -> (i32, i32) {
    %c0_i32 = arith.constant 0 : i32
    %c0_i32_0 = arith.constant 0 : i32
    %c0_i32_1 = arith.constant 0 : i32
    return %c0_i32, %c0_i32_0 : i32, i32
  }
  func.func @transform_2(%arg0: i32) -> (i32, i32, i32) {
    %c0_i32 = arith.constant 0 : i32
    %c0_i32_0 = arith.constant 0 : i32
    %c0_i32_1 = arith.constant 0 : i32
    return %arg0, %c0_i32, %c0_i32_0 : i32, i32, i32
  }
  func.func @transform_3(%arg0: i32) -> (i32, i32, i32) {
    %c0_i32 = arith.constant 0 : i32
    %c0_i32_0 = arith.constant 0 : i32
    %c0_i32_1 = arith.constant 0 : i32
    return %arg0, %c0_i32, %c0_i32_0 : i32, i32, i32
  }
}

</mosaic_0001>

<llo_original>
// kernel: tpu_custom_call.1
$region0: #{tpu_custom_call.1}
  #allocation0 [shape = 'u32[]', space=smem, size = 0x4, offset = 0x4, fixed_abs, tag = 'smem constant byte address 0x4 - core index']
  #allocation1 [shape = 'u32[72,128]{1,0:T(1,128)}', space=vmem, size = 0x9000, scoped, tag = 'internal scratch']
  %s0 = inlined_call_operand.vmem [shape: f32[8,16], index: 0, kind: input, shape index: {}]
  %s1 = inlined_call_operand.vmem [shape: f32[16,8], index: 1, kind: input, shape index: {}]
  %s2 = inlined_call_operand.hbm [shape: f32[8,16,16], index: 2, kind: input, shape index: {}]
  %s3 = inlined_call_operand.hbm [shape: f32[8,8,8], index: 3, kind: output, shape index: {}]
  %s4 = sld [smem:[#allocation0]]
  $region49: #{tpu_custom_call.1} parent=0
    _
  %s6 = ssub.s32 1, %s4
  %s7 = scalar_select 0, %s6, %s4
  $region1: #{tpu_custom_call.1} parent=0
    #allocation2 [shape = 'u8[65536]{0}', space=vmem, size = 0x10000, scoped, tag = 'input window, operand 2']
    #allocation3 [shape = 's32[2]{0}', space=sflag, size = 0x8, scoped, tag = 'scoped memory for tpu_custom_call.1']
    #allocation4 [shape = 's32[2]{0}', space=sflag, size = 0x8, scoped, tag = 'scoped memory for tpu_custom_call.1']
    #allocation5 [shape = 'u8[32768]{0}', space=vmem, size = 0x8000, scoped, tag = 'output window, operand 0']
    %8 = vsyncpa [#allocation3], 0
    %s9 = scalar_lea.sflag [#allocation3], 1
    %10 = vsyncpa %s9, 0
    %11 = vsyncpa [#allocation4], 0
    %s12 = scalar_lea.sflag [#allocation4], 1
    %13 = vsyncpa %s12, 0
    loop: start=0, step=1, limit=4
    $region2: #{tpu_custom_call.1} parent=1 // loop_pre_header
      _
    $region3: #{tpu_custom_call.1} parent=1 // loop_header
      %s15 = sphi 0, %s19
      %p16 = scmp.ge.s32.totalorder %s15, 4
      %s23 = sphi 0, %s23
      %s25 = sphi 0, %s23
      %s26 = sphi 0, %s25
      %s40 = sphi 0, %s26
      %s44 = sphi 0, %s44
      %s46 = sphi 0, %s44
      %s47 = sphi 0, %s46
      %s61 = sphi 0, %s47
      %s67 = sphi 0, %s69
      %s70 = sphi 0, %s67
      %s71 = sphi 0, %s70
      %s87 = sphi 0, %s71
      %s93 = sphi 0, %s95
      %s96 = sphi 0, %s93
      %s97 = sphi 0, %s96
      %s113 = sphi 0, %s97
    $region4: #{tpu_custom_call.1} parent=1 // loop_header_branch
      %18 = sbr.rel (%p16) target = $region8
    $region5: #{tpu_custom_call.1} parent=1 // loop_body
      %s20 = ssub.s32 %s15, 1
      %s21 = ssub.s32 %s15, 2
      %s22 = sadd.s32 %s15, 1
      %s24 = sadd.s32 %s23, 1
      %p27 = scmp.eq.s32.totalorder %s15, 1
      %p28 = scmp.ne.s32.totalorder %s23, %s25
      %p29 = scmp.eq.s32.totalorder %s15, 0
      %p30 = por %p28, %p29
      %p31 = scmp.ne.s32.totalorder %s23, %s25
      %p32 = scmp.eq.s32.totalorder %s20, 1
      %p33 = por %p31, %p32
      %p34 = scmp.ne.s32.totalorder %s25, %s26
      %p35 = scmp.eq.s32.totalorder %s20, 0
      %p36 = por %p34, %p35
      %p37 = scmp.ne.s32.totalorder %s25, %s26
      %p38 = scmp.eq.s32.totalorder %s21, 1
      %p39 = por %p37, %p38
      %p41 = scmp.ne.s32.totalorder %s26, %s40
      %p42 = scmp.eq.s32.totalorder %s21, 0
      %p43 = por %p41, %p42
      %s45 = sadd.s32 %s44, 1
      %p48 = scmp.eq.s32.totalorder %s15, 1
      %p49 = scmp.ne.s32.totalorder %s44, %s46
      %p50 = scmp.eq.s32.totalorder %s15, 0
      %p51 = por %p49, %p50
      %p52 = scmp.ne.s32.totalorder %s44, %s46
      %p53 = scmp.eq.s32.totalorder %s20, 1
      %p54 = por %p52, %p53
      %p55 = scmp.ne.s32.totalorder %s46, %s47
      %p56 = scmp.eq.s32.totalorder %s20, 0
      %p57 = por %p55, %p56
      %p58 = scmp.ne.s32.totalorder %s46, %s47
      %p59 = scmp.eq.s32.totalorder %s21, 1
      %p60 = por %p58, %p59
      %p62 = scmp.ne.s32.totalorder %s47, %s61
      %p63 = scmp.eq.s32.totalorder %s21, 0
      %p64 = por %p62, %p63
      %s65 = ssub.s32 %s15, %s22
      %p66 = scmp.eq.s32.totalorder %s65, 0
      %s68 = sadd.s32 %s67, 1
      %s69 = scalar_select %p66, %s67, %s68
      %p72 = pneg %p66
      %p73 = scmp.eq.s32.totalorder %s15, 1
      %p74 = por %p72, %p73
      %p75 = scmp.ne.s32.totalorder %s67, %s70
      %p76 = scmp.eq.s32.totalorder %s15, 0
      %p77 = por %p75, %p76
      %p78 = scmp.ne.s32.totalorder %s67, %s70
      %p79 = scmp.eq.s32.totalorder %s20, 1
      %p80 = por %p78, %p79
      %p81 = scmp.ne.s32.totalorder %s70, %s71
      %p82 = scmp.eq.s32.totalorder %s20, 0
      %p83 = por %p81, %p82
      %p84 = scmp.ne.s32.totalorder %s70, %s71
      %p85 = scmp.eq.s32.totalorder %s21, 1
      %p86 = por %p84, %p85
      %p88 = scmp.ne.s32.totalorder %s71, %s87
      %p89 = scmp.eq.s32.totalorder %s21, 0
      %p90 = por %p88, %p89
      %s91 = ssub.s32 %s15, %s22
      %p92 = scmp.eq.s32.totalorder %s91, 0
      %s94 = sadd.s32 %s93, 1
      %s95 = scalar_select %p92, %s93, %s94
      %p98 = pneg %p92
      %p99 = scmp.eq.s32.totalorder %s15, 1
      %p100 = por %p98, %p99
      %p101 = scmp.ne.s32.totalorder %s93, %s96
      %p102 = scmp.eq.s32.totalorder %s15, 0
      %p103 = por %p101, %p102
      %p104 = scmp.ne.s32.totalorder %s93, %s96
      %p105 = scmp.eq.s32.totalorder %s20, 1
      %p106 = por %p104, %p105
      %p107 = scmp.ne.s32.totalorder %s96, %s97
      %p108 = scmp.eq.s32.totalorder %s20, 0
      %p109 = por %p107, %p108
      %p110 = scmp.ne.s32.totalorder %s96, %s97
      %p111 = scmp.eq.s32.totalorder %s21, 1
      %p112 = por %p110, %p111
      %p114 = scmp.ne.s32.totalorder %s97, %s113
      %p115 = scmp.eq.s32.totalorder %s21, 0
      %p116 = por %p114, %p115
      %p117 = scmp.le.s32.totalorder 1, %s15
      %p118 = scmp.lt.s32.totalorder %s15, 3
      %p119 = pnand %p117, %p118
      %p120 = pneg %p119
      // Predicated region
      $region9: #{tpu_custom_call.1} parent=5 // pred_check
        _
      $region10: #{tpu_custom_call.1} parent=5 // pred_check_branch
        %122 = sbr.rel (%p119) target = $region12
      $region11: #{tpu_custom_call.1} parent=5 // pred_region
        %s123 = ssub.s32 %s15, 1
        // Predicated region
        $region13: #{tpu_custom_call.1} parent=11 // pred_check
          %p124 = pneg %p36
        $region14: #{tpu_custom_call.1} parent=11 // pred_check_branch
          %126 = sbr.rel (%p124) target = $region16
        $region15: #{tpu_custom_call.1} parent=11 // pred_region
          _
        $region16: #{tpu_custom_call.1} parent=11 // pred_fallthru
          _
        // Predicated region
        $region17: #{tpu_custom_call.1} parent=11 // pred_check
          %p127 = pneg %p57
        $region18: #{tpu_custom_call.1} parent=11 // pred_check_branch
          %129 = sbr.rel (%p127) target = $region20
        $region19: #{tpu_custom_call.1} parent=11 // pred_region
          _
        $region20: #{tpu_custom_call.1} parent=11 // pred_fallthru
          _
      $region12: #{tpu_custom_call.1} parent=5 // pred_fallthru
        _
      %p130 = scmp.lt.s32.totalorder %s15, 2
      // Predicated region
      $region21: #{tpu_custom_call.1} parent=5 // pred_check
        %p131 = pneg %p130
      $region22: #{tpu_custom_call.1} parent=5 // pred_check_branch
        %133 = sbr.rel (%p131) target = $region24
      $region23: #{tpu_custom_call.1} parent=5 // pred_region
        // Predicated region
        $region25: #{tpu_custom_call.1} parent=23 // pred_check
          %p134 = pneg %p77
        $region26: #{tpu_custom_call.1} parent=23 // pred_check_branch
          %136 = sbr.rel (%p134) target = $region28
        $region27: #{tpu_custom_call.1} parent=23 // pred_region
          %s137 = sand.u32 %s67, 1
          %s138 = scalar_lea.sflag [#allocation3], %s137
          %s139 = sand.u32 %s67, 1
          %s140 = smul.addr %s139, 64
          %s141 = scalar_lea.vmem [#allocation2], %s140
          %s142 = smul.u32 4, %s15
          %144 = vsyncadd %s138, 0
          %s145 = smul.addr %s142, 2
          %s146 = smul.addr %s145, 8
          %s147 = scalar_lea.hbm %s2, %s146
          %s148 = sshll.u32 %s147, 4
          %s149 = int_to_ptr.hbm [resolvable:$true] %s148
          %s150 = sshll.u32 %s141, 4
          %s151 = int_to_ptr.vmem [resolvable:$true] %s150
          %156 = dma.hbm_to_vmem [thread:$0]  %s149, 1024, %s151, %s138, 128, 128, 8
        $region28: #{tpu_custom_call.1} parent=23 // pred_fallthru
          _
      $region24: #{tpu_custom_call.1} parent=5 // pred_fallthru
        _
      %p157 = scmp.le.s32.totalorder 1, %s15
      %p158 = scmp.lt.s32.totalorder %s15, 3
      %p159 = pnand %p157, %p158
      %p160 = pneg %p159
      // Predicated region
      $region29: #{tpu_custom_call.1} parent=5 // pred_check
        _
      $region30: #{tpu_custom_call.1} parent=5 // pred_check_branch
        %162 = sbr.rel (%p159) target = $region32
      $region31: #{tpu_custom_call.1} parent=5 // pred_region
        %s163 = ssub.s32 %s15, 1
        %s164 = sand.u32 %s70, 1
        %s165 = scalar_lea.sflag [#allocation3], %s164
        %s166 = sand.u32 %s70, 1
        %s167 = smul.addr %s166, 64
        %s168 = scalar_lea.vmem [#allocation2], %s167
        // Predicated region
        $region33: #{tpu_custom_call.1} parent=31 // pred_check
          %p169 = pneg %p83
        $region34: #{tpu_custom_call.1} parent=31 // pred_check_branch
          %171 = sbr.rel (%p169) target = $region36
        $region35: #{tpu_custom_call.1} parent=31 // pred_region
          %173 = dma.done %s165, 1024
        $region36: #{tpu_custom_call.1} parent=31 // pred_fallthru
          _
        %p174 = pneg %p36
        %p175 = pneg %p33
        %p176 = pneg %p57
        %p177 = pneg %p54
        %s178 = sand.u32 %s70, 1
        %s179 = scalar_lea.sflag [#allocation3], %s178
        %s180 = sand.u32 %s70, 1
        %s181 = smul.addr %s180, 64
        %s182 = scalar_lea.vmem [#allocation2], %s181
        %p183 = pneg %p83
        %p184 = pneg %p80
        %p185 = pneg %p109
        %p186 = pneg %p106
        %s187 = sand.u32 %s96, 1
        %s188 = scalar_lea.sflag [#allocation4], %s187
        %s189 = sand.u32 %s96, 1
        %s190 = smul.addr %s189, 32
        %s191 = scalar_lea.vmem [#allocation5], %s190
        %s192 = smul.u32 4, %s20
        %s193 = smul.u32 4, %s20
        %v194 = vld [vmem:[%s168] sm:$0xff]
        %v195 = vld [vmem:[%s168 + $0x8] sm:$0xff]
        %v196 = vld [vmem:[%s168 + $0x10] sm:$0xff]
        %v197 = vld [vmem:[%s168 + $0x18] sm:$0xff]
        %v198 = vld [vmem:[%s168 + $0x20] sm:$0xff]
        %v199 = vld [vmem:[%s168 + $0x28] sm:$0xff]
        %v200 = vld [vmem:[%s168 + $0x30] sm:$0xff]
        %v201 = vld [vmem:[%s168 + $0x38] sm:$0xff]
        %v202 = vld [vmem:[%s1] sm:$0xff]
        %v203 = vld [vmem:[%s1 + $0x8] sm:$0xff]
        %vm204 = vcmask 130048
        %v206 = vsel %vm204, %v194, 0
        %v209 = vsel %vm204, %v195, 0
        %v212 = vsel %vm204, %v196, 0
        %v215 = vsel %vm204, %v197, 0
        %v218 = vsel %vm204, %v198, 0
        %v221 = vsel %vm204, %v199, 0
        %v224 = vsel %vm204, %v200, 0
        %v227 = vsel %vm204, %v201, 0
        %229 = vmatpush.msra.mxu0 0.0
        %230 = vmatpush.msra.mxu0 0.0
        %231 = vmatpush.msra.mxu0 0.0
        %232 = vmatpush.msra.mxu0 0.0
        %233 = vmatpush.msra.mxu0 0.0
        %234 = vmatpush.msra.mxu0 0.0
        %235 = vmatpush.msra.mxu0 0.0
        %236 = vmatpush.msra.mxu0 0.0
        %237 = vmatpush.msra.mxu0 0.0
        %238 = vmatpush.msra.mxu0 0.0
        %239 = vmatpush.msra.mxu0 0.0
        %240 = vmatpush.msra.mxu0 0.0
        %241 = vmatpush.msra.mxu0 0.0
        %242 = vmatpush.msra.mxu0 0.0
        %243 = vmatpush.msra.mxu0 %v203
        %244 = vmatpush.msra.mxu0 %v202
        %245 = vmatmul.f32.gmra.mxu0 %v206
        %v246 = vpop.f32.mrf.mxu0
        %v247 = vadd.f32 0.0, %v246
        %248 = vmatmul.f32.gmra.mxu0 %v209
        %v249 = vpop.f32.mrf.mxu0
        %v250 = vadd.f32 0.0, %v249
        %251 = vmatmul.f32.gmra.mxu0 %v212
        %v252 = vpop.f32.mrf.mxu0
        %v253 = vadd.f32 0.0, %v252
        %254 = vmatmul.f32.gmra.mxu0 %v215
        %v255 = vpop.f32.mrf.mxu0
        %v256 = vadd.f32 0.0, %v255
        %257 = vmatmul.f32.gmra.mxu0 %v218
        %v258 = vpop.f32.mrf.mxu0
        %v259 = vadd.f32 0.0, %v258
        %260 = vmatmul.f32.gmra.mxu0 %v221
        %v261 = vpop.f32.mrf.mxu0
        %v262 = vadd.f32 0.0, %v261
        %263 = vmatmul.f32.gmra.mxu0 %v224
        %v264 = vpop.f32.mrf.mxu0
        %v265 = vadd.f32 0.0, %v264
        %266 = vmatmul.f32.gmra.mxu0 %v227
        %v267 = vpop.f32.mrf.mxu0
        %v268 = vadd.f32 0.0, %v267
        %269 = vdwg.mxu0
        %v270 = vld [vmem:[%s0] sm:$0xff]
        %v272 = vsel %vm204, %v270, 0
        %274 = vmatpush.msra.mxu0 0.0
        %275 = vmatpush.msra.mxu0 0.0
        %276 = vmatpush.msra.mxu0 0.0
        %277 = vmatpush.msra.mxu0 0.0
        %278 = vmatpush.msra.mxu0 0.0
        %279 = vmatpush.msra.mxu0 0.0
        %280 = vmatpush.msra.mxu0 0.0
        %281 = vmatpush.msra.mxu0 0.0
        %282 = vmatpush.msra.mxu0 0.0
        %283 = vmatpush.msra.mxu0 0.0
        %284 = vmatpush.msra.mxu0 0.0
        %285 = vmatpush.msra.mxu0 0.0
        %286 = vmatpush.msra.mxu0 0.0
        %287 = vmatpush.msra.mxu0 0.0
        %288 = vmatpush.msra.mxu0 %v250
        %289 = vmatpush.msra.mxu0 %v247
        %290 = vmatmul.f32.gmra.mxu0 %v272
        %v291 = vpop.f32.mrf.mxu0
        %v292 = vadd.f32 0.0, %v291
        %293 = vdwg.mxu0
        %294 = vmatpush.msra.mxu0 0.0
        %295 = vmatpush.msra.mxu0 0.0
        %296 = vmatpush.msra.mxu0 0.0
        %297 = vmatpush.msra.mxu0 0.0
        %298 = vmatpush.msra.mxu0 0.0
        %299 = vmatpush.msra.mxu0 0.0
        %300 = vmatpush.msra.mxu0 0.0
        %301 = vmatpush.msra.mxu0 0.0
        %302 = vmatpush.msra.mxu0 0.0
        %303 = vmatpush.msra.mxu0 0.0
        %304 = vmatpush.msra.mxu0 0.0
        %305 = vmatpush.msra.mxu0 0.0
        %306 = vmatpush.msra.mxu0 0.0
        %307 = vmatpush.msra.mxu0 0.0
        %308 = vmatpush.msra.mxu0 %v256
        %309 = vmatpush.msra.mxu0 %v253
        %310 = vmatmul.f32.gmra.mxu0 %v272
        %v311 = vpop.f32.mrf.mxu0
        %v312 = vadd.f32 0.0, %v311
        %313 = vdwg.mxu0
        %314 = vmatpush.msra.mxu0 0.0
        %315 = vmatpush.msra.mxu0 0.0
        %316 = vmatpush.msra.mxu0 0.0
        %317 = vmatpush.msra.mxu0 0.0
        %318 = vmatpush.msra.mxu0 0.0
        %319 = vmatpush.msra.mxu0 0.0
        %320 = vmatpush.msra.mxu0 0.0
        %321 = vmatpush.msra.mxu0 0.0
        %322 = vmatpush.msra.mxu0 0.0
        %323 = vmatpush.msra.mxu0 0.0
        %324 = vmatpush.msra.mxu0 0.0
        %325 = vmatpush.msra.mxu0 0.0
        %326 = vmatpush.msra.mxu0 0.0
        %327 = vmatpush.msra.mxu0 0.0
        %328 = vmatpush.msra.mxu0 %v262
        %329 = vmatpush.msra.mxu0 %v259
        %330 = vmatmul.f32.gmra.mxu0 %v272
        %v331 = vpop.f32.mrf.mxu0
        %v332 = vadd.f32 0.0, %v331
        %333 = vdwg.mxu0
        %334 = vmatpush.msra.mxu0 0.0
        %335 = vmatpush.msra.mxu0 0.0
        %336 = vmatpush.msra.mxu0 0.0
        %337 = vmatpush.msra.mxu0 0.0
        %338 = vmatpush.msra.mxu0 0.0
        %339 = vmatpush.msra.mxu0 0.0
        %340 = vmatpush.msra.mxu0 0.0
        %341 = vmatpush.msra.mxu0 0.0
        %342 = vmatpush.msra.mxu0 0.0
        %343 = vmatpush.msra.mxu0 0.0
        %344 = vmatpush.msra.mxu0 0.0
        %345 = vmatpush.msra.mxu0 0.0
        %346 = vmatpush.msra.mxu0 0.0
        %347 = vmatpush.msra.mxu0 0.0
        %348 = vmatpush.msra.mxu0 %v268
        %349 = vmatpush.msra.mxu0 %v265
        %350 = vmatmul.f32.gmra.mxu0 %v272
        %v351 = vpop.f32.mrf.mxu0
        %v352 = vadd.f32 0.0, %v351
        %353 = vdwg.mxu0
        %vm354 = vcmask 64512
        %355 = vst.msk [vmem:[%s191] sm:$0xff] %vm354, %v292
        %356 = vst.msk [vmem:[%s191 + $0x8] sm:$0xff] %vm354, %v312
        %357 = vst.msk [vmem:[%s191 + $0x10] sm:$0xff] %vm354, %v332
        %358 = vst.msk [vmem:[%s191 + $0x18] sm:$0xff] %vm354, %v352
        %s359 = sand.u32 %s96, 1
        %s360 = scalar_lea.sflag [#allocation4], %s359
        %s361 = sand.u32 %s96, 1
        %s362 = smul.addr %s361, 32
        %s363 = scalar_lea.vmem [#allocation5], %s362
        // Predicated region
        $region37: #{tpu_custom_call.1} parent=31 // pred_check
          %p364 = pneg %p106
        $region38: #{tpu_custom_call.1} parent=31 // pred_check_branch
          %366 = sbr.rel (%p364) target = $region40
        $region39: #{tpu_custom_call.1} parent=31 // pred_region
          %s367 = smul.u32 4, %s20
          %369 = vsyncadd %s360, 0
          %s370 = smul.addr %s367, 8
          %s371 = scalar_lea.hbm %s3, %s370
          %s372 = sshll.u32 %s363, 4
          %s373 = int_to_ptr.vmem [resolvable:$true] %s372
          %s374 = sshll.u32 %s371, 4
          %s375 = int_to_ptr.hbm [resolvable:$true] %s374
          %380 = dma.vmem_to_hbm [thread:$0]  %s373, 512, %s375, %s360, 128, 128, 8
        $region40: #{tpu_custom_call.1} parent=31 // pred_fallthru
          _
      $region32: #{tpu_custom_call.1} parent=5 // pred_fallthru
        _
      %p381 = scmp.le.s32.totalorder 2, %s15
      // Predicated region
      $region41: #{tpu_custom_call.1} parent=5 // pred_check
        %p382 = pneg %p381
      $region42: #{tpu_custom_call.1} parent=5 // pred_check_branch
        %384 = sbr.rel (%p382) target = $region44
      $region43: #{tpu_custom_call.1} parent=5 // pred_region
        %s385 = ssub.s32 %s15, 2
        // Predicated region
        $region45: #{tpu_custom_call.1} parent=43 // pred_check
          %p386 = pneg %p112
        $region46: #{tpu_custom_call.1} parent=43 // pred_check_branch
          %388 = sbr.rel (%p386) target = $region48
        $region47: #{tpu_custom_call.1} parent=43 // pred_region
          %s389 = sand.u32 %s97, 1
          %s390 = scalar_lea.sflag [#allocation4], %s389
          %s391 = sand.u32 %s97, 1
          %s392 = smul.addr %s391, 32
          %s393 = scalar_lea.vmem [#allocation5], %s392
          %395 = dma.done %s390, 512
        $region48: #{tpu_custom_call.1} parent=43 // pred_fallthru
          _
      $region44: #{tpu_custom_call.1} parent=5 // pred_fallthru
        _
    $region6: #{tpu_custom_call.1} parent=1 // loop_footer
      %s19 = sadd.s32 1, %s15
    $region7: #{tpu_custom_call.1} parent=1 // loop_footer_branch
      %14 = sbr.rel target = $region3
    $region8: #{tpu_custom_call.1} parent=1 // loop_exit
      _
    %396 = vsyncpa [#allocation3], 1
    %s397 = scalar_lea.sflag [#allocation3], 1
    %398 = vsyncpa %s397, 1
    %399 = vsyncpa [#allocation4], 1
    %s400 = scalar_lea.sflag [#allocation4], 1
    %401 = vsyncpa %s400, 1

</llo_original>
